<compile_context>
chip_gen: v7x
topology: tpu7x:2x2x1
jax: 0.10.0
libtpu: 0.0.40
codegen_flags: <defaults>
</compile_context>

<pallas_src>
import functools
import math

import jax
import jax.numpy as jnp
from jax import lax
from jax.experimental import pallas as pl
from jax.experimental.pallas import tpu as pltpu

_TM_MAX = 512                      # max rows per matmul tile (multiple of 16 for bf16 tiles)
_TBN_MAX = 2048                    # max rows per BN/LeakyReLU tile (mem-bound pass)
_VMEM_LIMIT = 48 * 1024 * 1024     # scoped-VMEM cap: fits v5e/v6e (128 MiB) and v7x (64 MiB)
_VMEM_BUDGET = 36 * 1024 * 1024    # target double-buffered working set for tile selection


def _round_up(x, m):
    return ((x + m - 1) // m) * m


def _pick_tm(m, kp, cp, out_bytes):
    """Largest row tile (multiple of 16, <= _TM_MAX) whose double-buffered set fits VMEM."""
    tm = min(_round_up(m, 16), _TM_MAX)
    while True:
        need = (2 * tm * kp * 2          # A tiles, bf16, double buffered
                + 2 * kp * cp * 2        # weight tile, bf16, double buffered
                + 2 * tm * cp * out_bytes  # output tile, double buffered
                + 2 * 8 * cp * 4)        # per-tile stats block
        if need <= _VMEM_BUDGET or tm <= 16:
            return tm
        tm = max(_round_up(tm // 2, 16), 16)


# ---------------------------------------------------------------------------
# Pallas kernels
# ---------------------------------------------------------------------------
def _mm_bias_act_kernel(a_ref, w_ref, b_ref, y_ref, *, slope, apply_act, apply_sigmoid):
    """y = act(a @ w + b); a:(tm,K) bf16, w:(K,C) bf16, b:(1,C) f32, f32 accumulate."""
    acc = jnp.dot(a_ref[...], w_ref[...], preferred_element_type=jnp.float32)
    acc = acc + b_ref[...]
    if apply_act:
        acc = jnp.where(acc >= 0, acc, slope * acc)
    if apply_sigmoid:
        acc = 1.0 / (1.0 + jnp.exp(-acc))
    y_ref[...] = acc.astype(y_ref.dtype)


def _mm_stats_kernel(a_ref, w_ref, z_ref, stats_ref):
    """z = a @ w (bf16 operands, f32 acc); per-tile channel stats into stats_ref.

    stats_ref block is (1, 8, C): sublane 0 = sum(z), sublane 1 = sum(z*z), rest 0.
    Each grid step writes its own stats block, so the M axis stays "parallel"
    (no resident accumulator; v7x megacore can shard the dominant matmul).
    """
    z = jnp.dot(a_ref[...], w_ref[...], preferred_element_type=jnp.float32)
    z_ref[...] = z.astype(z_ref.dtype)
    c = z.shape[1]
    zsum = jnp.sum(z, axis=0, keepdims=True)          # (1, C)
    zssq = jnp.sum(z * z, axis=0, keepdims=True)      # (1, C)
    row = lax.broadcasted_iota(jnp.int32, (8, c), 0)
    stats_ref[0] = jnp.where(row == 0, zsum, 0.0) + jnp.where(row == 1, zssq, 0.0)


def _bn_lrelu_kernel(z_ref, s_ref, b_ref, y_ref, *, slope):
    """y = LeakyReLU(z * scale + shift) with per-channel f32 scale/shift."""
    y = z_ref[...] * s_ref[...] + b_ref[...]
    y_ref[...] = jnp.where(y >= 0, y, slope * y).astype(y_ref.dtype)


# ---------------------------------------------------------------------------
# Wrapper-side layout plumbing (NHWC im2col, torch-OIHW weight flattening)
# ---------------------------------------------------------------------------
def _im2col_nhwc(x, kh, kw, stride, pad):
    """NHWC input -> (M, K) patch matrix; K ordered (kh, kw, c_in), channel fastest."""
    n, h, w, c = x.shape
    xp = jnp.pad(x, ((0, 0), (pad, pad), (pad, pad), (0, 0)))
    h_out = (h + 2 * pad - kh) // stride + 1
    w_out = (w + 2 * pad - kw) // stride + 1
    taps = []
    for di in range(kh):
        for dj in range(kw):
            taps.append(xp[:, di:di + stride * h_out:stride,
                           dj:dj + stride * w_out:stride, :])
    p = jnp.stack(taps, axis=3)                       # (N, Ho, Wo, kh*kw, C)
    return p.reshape(n * h_out * w_out, kh * kw * c), h_out, w_out


def _w_to_2d(w):
    """torch OIHW weight -> (K, C_out) bf16 with K ordered (kh, kw, C_in)."""
    c_out, c_in, kh, kw = w.shape
    return jnp.transpose(w, (2, 3, 1, 0)).reshape(kh * kw * c_in, c_out).astype(jnp.bfloat16)


def _pad2d(a, rows, cols):
    r, c = a.shape
    if rows == r and cols == c:
        return a
    return jnp.pad(a, ((0, rows - r), (0, cols - c)))


# ---------------------------------------------------------------------------
# Layer wrappers (NHWC in, NHWC out)
# ---------------------------------------------------------------------------
def conv2d_bias_act_pallas(x, w, b, *, stride, pad, slope, sigmoid=False):
    n = x.shape[0]
    c_out, _, kh, kw = w.shape
    patches, h_out, w_out = _im2col_nhwc(x.astype(jnp.bfloat16), kh, kw, stride, pad)
    m, k = patches.shape

    kp = _round_up(k, 128)                  # lane-dense K (zero-padded columns)
    cp = 128 if c_out <= 16 else c_out      # lane-pad the narrow final (1-ch) conv output
    # intermediate activations with lane-aligned channels are stored bf16; otherwise f32
    out_dtype = jnp.bfloat16 if (slope is not None and not sigmoid and cp % 128 == 0) \
        else jnp.float32
    out_bytes = jnp.dtype(out_dtype).itemsize

    w2d = _pad2d(_w_to_2d(w), kp, cp)
    b2d = _pad2d(b.reshape(1, c_out).astype(jnp.float32), 1, cp)

    tm = _pick_tm(m, kp, cp, out_bytes)
    mp = _round_up(m, tm)
    patches = _pad2d(patches, mp, kp)
    grid = (mp // tm,)

    kernel = functools.partial(
        _mm_bias_act_kernel,
        slope=0.0 if slope is None else float(slope),
        apply_act=slope is not None,
        apply_sigmoid=bool(sigmoid))

    y2d = pl.pallas_call(
        kernel,
        out_shape=jax.ShapeDtypeStruct((mp, cp), out_dtype),
        grid_spec=pltpu.PrefetchScalarGridSpec(
            num_scalar_prefetch=0,
            grid=grid,
            in_specs=[
                pl.BlockSpec((tm, kp), lambda i: (i, 0)),
                pl.BlockSpec((kp, cp), lambda i: (0, 0)),
                pl.BlockSpec((1, cp), lambda i: (0, 0)),
            ],
            out_specs=pl.BlockSpec((tm, cp), lambda i: (i, 0)),
        ),
        compiler_params=pltpu.CompilerParams(
            dimension_semantics=("parallel",),
            vmem_limit_bytes=_VMEM_LIMIT,
        ),
        cost_estimate=pl.CostEstimate(
            flops=2 * mp * kp * cp,
            transcendentals=mp * cp if sigmoid else 0,
            bytes_accessed=2 * (mp * kp + kp * cp) + 4 * cp + out_bytes * mp * cp),
    )(patches, w2d, b2d)

    y2d = y2d[:m, :c_out]
    return y2d.reshape(n, h_out, w_out, c_out)


def conv2d_bn_lrelu_pallas(x, w, gamma, beta, *, stride, pad, eps, slope):
    n = x.shape[0]
    c_out, _, kh, kw = w.shape
    patches, h_out, w_out = _im2col_nhwc(x.astype(jnp.bfloat16), kh, kw, stride, pad)
    m, k = patches.shape

    kp = _round_up(k, 128)
    w2d = _pad2d(_w_to_2d(w), kp, c_out)
    y_dtype = jnp.bfloat16 if c_out % 128 == 0 else jnp.float32

    tm = _pick_tm(m, kp, c_out, 4)                      # z tile is f32
    tbn = tm * max(1, min(pl.cdiv(m, tm), max(1, _TBN_MAX // tm)))   # big tile for BN pass
    mp = _round_up(m, tbn)                              # zero rows contribute 0 to the stats
    patches = _pad2d(patches, mp, kp)
    n_tiles = mp // tm

    z2d, stats = pl.pallas_call(
        _mm_stats_kernel,
        out_shape=(
            jax.ShapeDtypeStruct((mp, c_out), jnp.float32),
            jax.ShapeDtypeStruct((n_tiles, 8, c_out), jnp.float32),
        ),
        grid_spec=pltpu.PrefetchScalarGridSpec(
            num_scalar_prefetch=0,
            grid=(n_tiles,),
            in_specs=[
                pl.BlockSpec((tm, kp), lambda i: (i, 0)),
                pl.BlockSpec((kp, c_out), lambda i: (0, 0)),
            ],
            out_specs=(
                pl.BlockSpec((tm, c_out), lambda i: (i, 0)),
                pl.BlockSpec((1, 8, c_out), lambda i: (i, 0, 0)),
            ),
        ),
        compiler_params=pltpu.CompilerParams(
            dimension_semantics=("parallel",),          # no resident accumulator -> megacore OK
            vmem_limit_bytes=_VMEM_LIMIT,
        ),
        cost_estimate=pl.CostEstimate(
            flops=2 * mp * kp * c_out + 3 * mp * c_out,
            transcendentals=0,
            bytes_accessed=2 * (mp * kp + kp * c_out) + 4 * (mp + 8 * n_tiles) * c_out),
    )(patches, w2d)

    # Tiny (tiles,8,C) reduction + BN coefficient math in the wrapper (negligible cost).
    st = jnp.sum(stats, axis=0)                         # (8, C): row0=sum, row1=sum of squares
    mean = st[0] / m
    var = st[1] / m - mean * mean                       # biased variance (PyTorch train mode)
    inv_std = lax.rsqrt(var + eps)
    g32 = gamma.astype(jnp.float32)
    scale = (g32 * inv_std).reshape(1, c_out)
    shift = (beta.astype(jnp.float32) - mean * g32 * inv_std).reshape(1, c_out)

    bn_kernel = functools.partial(_bn_lrelu_kernel, slope=float(slope))
    y2d = pl.pallas_call(
        bn_kernel,
        out_shape=jax.ShapeDtypeStruct((mp, c_out), y_dtype),
        grid_spec=pltpu.PrefetchScalarGridSpec(
            num_scalar_prefetch=0,
            grid=(mp // tbn,),
            in_specs=[
                pl.BlockSpec((tbn, c_out), lambda i: (i, 0)),
                pl.BlockSpec((1, c_out), lambda i: (0, 0)),
                pl.BlockSpec((1, c_out), lambda i: (0, 0)),
            ],
            out_specs=pl.BlockSpec((tbn, c_out), lambda i: (i, 0)),
        ),
        compiler_params=pltpu.CompilerParams(
            dimension_semantics=("parallel",),
            vmem_limit_bytes=_VMEM_LIMIT,
        ),
        cost_estimate=pl.CostEstimate(
            flops=4 * mp * c_out,
            transcendentals=0,
            bytes_accessed=(4 + jnp.dtype(y_dtype).itemsize) * mp * c_out + 8 * c_out),
    )(z2d, scale, shift)

    y2d = y2d[:m]
    return y2d.reshape(n, h_out, w_out, c_out)


# ---------------------------------------------------------------------------
# NLayerDiscriminator: params + forward
# ---------------------------------------------------------------------------
def init_discriminator_params(key, input_nc, ndf=64, n_layers=3):
    kw4, padw = 4, 1
    keys = list(jax.random.split(key, 3 * n_layers + 4))

    def nxt():
        return keys.pop(0)

    def conv_w(k, c_out, c_in):
        fan_in = c_in * kw4 * kw4
        return jax.random.normal(k, (c_out, c_in, kw4, kw4), jnp.float32) / math.sqrt(fan_in)

    layers = [dict(kind="conv_lrelu", stride=2, pad=padw,
                   w=conv_w(nxt(), ndf, input_nc),
                   b=0.01 * jax.random.normal(nxt(), (ndf,), jnp.float32))]

    nf_mult, nf_mult_prev = 1, 1
    for n in range(1, n_layers):
        nf_mult_prev, nf_mult = nf_mult, min(2 ** n, 8)
        c_in, c_out = ndf * nf_mult_prev, ndf * nf_mult
        layers.append(dict(kind="conv_bn_lrelu", stride=2, pad=padw,
                           w=conv_w(nxt(), c_out, c_in),
                           gamma=1.0 + 0.1 * jax.random.normal(nxt(), (c_out,), jnp.float32),
                           beta=0.1 * jax.random.normal(nxt(), (c_out,), jnp.float32)))

    nf_mult_prev, nf_mult = nf_mult, min(2 ** n_layers, 8)
    c_in, c_out = ndf * nf_mult_prev, ndf * nf_mult
    layers.append(dict(kind="conv_bn_lrelu", stride=1, pad=padw,
                       w=conv_w(nxt(), c_out, c_in),
                       gamma=1.0 + 0.1 * jax.random.normal(nxt(), (c_out,), jnp.float32),
                       beta=0.1 * jax.random.normal(nxt(), (c_out,), jnp.float32)))

    layers.append(dict(kind="conv", stride=1, pad=padw,
                       w=conv_w(nxt(), 1, c_out),
                       b=0.01 * jax.random.normal(nxt(), (1,), jnp.float32)))
    return layers


def nlayer_discriminator_forward(x, layers, *, slope=0.2, eps=1e-5, use_sigmoid=False):
    """x: NCHW (PyTorch layout).  Activations are kept NHWC (channels on lanes) internally."""
    y = jnp.transpose(x, (0, 2, 3, 1))
    for layer in layers:
        if layer["kind"] == "conv_lrelu":
            y = conv2d_bias_act_pallas(y, layer["w"], layer["b"],
                                       stride=layer["stride"], pad=layer["pad"], slope=slope)
        elif layer["kind"] == "conv_bn_lrelu":
            y = conv2d_bn_lrelu_pallas(y, layer["w"], layer["gamma"], layer["beta"],
                                       stride=layer["stride"], pad=layer["pad"],
                                       eps=eps, slope=slope)
        else:  # final 1-channel conv (+ optional sigmoid), lane-padded to 128 internally
            y = conv2d_bias_act_pallas(y, layer["w"], layer["b"],
                                       stride=layer["stride"], pad=layer["pad"],
                                       slope=None, sigmoid=use_sigmoid)
    return jnp.transpose(y, (0, 3, 1, 2))


# ---------------------------------------------------------------------------
# Pure-JAX reference (mirrors the bf16-operand / f32-accumulate policy of the kernels)
# ---------------------------------------------------------------------------
def _ref_forward(x, layers, *, slope=0.2, eps=1e-5, use_sigmoid=False):
    for layer in layers:
        s, p = layer["stride"], layer["pad"]
        y = lax.conv_general_dilated(
            x.astype(jnp.bfloat16), layer["w"].astype(jnp.bfloat16),
            (s, s), ((p, p), (p, p)),
            dimension_numbers=("NCHW", "OIHW", "NCHW"),
            preferred_element_type=jnp.float32)
        if layer["kind"] == "conv_lrelu":
            y = y + layer["b"].reshape(1, -1, 1, 1)
            y = jnp.where(y >= 0, y, slope * y)
        elif layer["kind"] == "conv_bn_lrelu":
            mean = jnp.mean(y, axis=(0, 2, 3), keepdims=True)
            var = jnp.mean((y - mean) ** 2, axis=(0, 2, 3), keepdims=True)
            y = (y - mean) * lax.rsqrt(var + eps)
            y = y * layer["gamma"].reshape(1, -1, 1, 1) + layer["beta"].reshape(1, -1, 1, 1)
            y = jnp.where(y >= 0, y, slope * y)
        else:
            y = y + layer["b"].reshape(1, -1, 1, 1)
            if use_sigmoid:
                y = jax.nn.sigmoid(y)
        x = y
    return x


if __name__ == "__main__":
    key = jax.random.PRNGKey(0)
    k_params, k_x = jax.random.split(key)

    input_nc, ndf, n_layers = 3, 64, 3
    batch, spatial = 2, 32

    layers = init_discriminator_params(k_params, input_nc, ndf=ndf, n_layers=n_layers)
    x = jax.random.normal(k_x, (batch, input_nc, spatial, spatial), dtype=jnp.float32)

    y = nlayer_discriminator_forward(x, layers)
    y = jax.block_until_ready(y)

    y_ref = _ref_forward(x, layers)
    assert y.shape == y_ref.shape == (batch, 1, 2, 2), (y.shape, y_ref.shape)
    max_err = float(jnp.max(jnp.abs(y - y_ref)))
    assert jnp.allclose(y, y_ref, rtol=2e-2, atol=2e-2), max_err

    print("KERNEL_OK")
</pallas_src>

<mosaic_0001>
module attributes {stable_mosaic.version = 11 : i64} {
  func.func @_mm_bias_act_kernel(%arg0: i32, %arg1: memref<512x128xbf16, #tpu.memory_space<vmem>>, %arg2: memref<128x64xbf16, #tpu.memory_space<vmem>>, %arg3: memref<1x64xf32, #tpu.memory_space<vmem>>, %arg4: memref<512x64xf32, #tpu.memory_space<vmem>>) attributes {dimension_semantics = [#tpu.dimension_semantics<parallel>], iteration_bounds = array<i64: 1>, scalar_prefetch = 0 : i64, scratch_operands = 0 : i64, tpu.core_type = #tpu.core_type<tc>, window_params = [{transform_indices = @transform_0, window_bounds = array<i64: 512, 128>}, {pipeline_mode = #tpu.pipeline_mode<synchronous>, transform_indices = @transform_1, window_bounds = array<i64: 128, 64>}, {pipeline_mode = #tpu.pipeline_mode<synchronous>, transform_indices = @transform_2, window_bounds = array<i64: 1, 64>}, {transform_indices = @transform_3, window_bounds = array<i64: 512, 64>}]} {
    %c0 = arith.constant 0 : index
    %c0_0 = arith.constant 0 : index
    %0 = vector.load %arg1[%c0, %c0_0] : memref<512x128xbf16, #tpu.memory_space<vmem>>, vector<512x128xbf16>
    %c0_1 = arith.constant 0 : index
    %c0_2 = arith.constant 0 : index
    %1 = vector.load %arg2[%c0_1, %c0_2] : memref<128x64xbf16, #tpu.memory_space<vmem>>, vector<128x64xbf16>
    %cst = arith.constant dense<0.000000e+00> : vector<512x64xf32>
    %2 = tpu.matmul %0, %1, %cst {dimension_numbers = #tpu.dot_dimension_numbers<[1], [0], [0], [1], [0, 0, 1, 1], [], []>} : vector<512x128xbf16>, vector<128x64xbf16>, vector<512x64xf32> -> vector<512x64xf32>
    %c0_3 = arith.constant 0 : index
    %c0_4 = arith.constant 0 : index
    %3 = vector.load %arg3[%c0_3, %c0_4] : memref<1x64xf32, #tpu.memory_space<vmem>>, vector<1x64xf32>
    %4 = vector.broadcast %3 : vector<1x64xf32> to vector<512x64xf32>
    %5 = arith.addf %2, %4 : vector<512x64xf32>
    %cst_5 = arith.constant 0.000000e+00 : f32
    %6 = vector.broadcast %cst_5 : f32 to vector<512x64xf32>
    %7 = arith.cmpf oge, %5, %6 : vector<512x64xf32>
    %cst_6 = arith.constant 2.000000e-01 : f32
    %8 = vector.broadcast %cst_6 : f32 to vector<512x64xf32>
    %9 = arith.mulf %8, %5 : vector<512x64xf32>
    %10 = arith.select %7, %5, %9 : vector<512x64xi1>, vector<512x64xf32>
    %c0_7 = arith.constant 0 : index
    %c0_8 = arith.constant 0 : index
    %11 = vector.load %arg4[%c0_7, %c0_8] : memref<512x64xf32, #tpu.memory_space<vmem>>, vector<512x64xf32>
    tpu.vector_store %arg4[%c0_7, %c0_8], %10 {strides = array<i32>} : memref<512x64xf32, #tpu.memory_space<vmem>>, vector<512x64xf32>,
    return
  }
  func.func @transform_0(%arg0: i32) -> (i32, i32) {
    %c0_i32 = arith.constant 0 : i32
    %c0_i32_0 = arith.constant 0 : i32
    return %arg0, %c0_i32 : i32, i32
  }
  func.func @transform_1(%arg0: i32) -> (i32, i32) {
    %c0_i32 = arith.constant 0 : i32
    %c0_i32_0 = arith.constant 0 : i32
    %c0_i32_1 = arith.constant 0 : i32
    return %c0_i32, %c0_i32_0 : i32, i32
  }
  func.func @transform_2(%arg0: i32) -> (i32, i32) {
    %c0_i32 = arith.constant 0 : i32
    %c0_i32_0 = arith.constant 0 : i32
    %c0_i32_1 = arith.constant 0 : i32
    return %c0_i32, %c0_i32_0 : i32, i32
  }
  func.func @transform_3(%arg0: i32) -> (i32, i32) {
    %c0_i32 = arith.constant 0 : i32
    %c0_i32_0 = arith.constant 0 : i32
    return %arg0, %c0_i32 : i32, i32
  }
}

</mosaic_0001>

<llo_original>
// kernel: tpu_custom_call.1
$region0: #{tpu_custom_call.1}
  #allocation0 [shape = 'u32[]', space=smem, size = 0x4, offset = 0x4, fixed_abs, tag = 'smem constant byte address 0x4 - core index']
  #allocation1 [shape = 'u32[144,128]{1,0:T(1,128)}', space=vmem, size = 0x12000, scoped, tag = 'internal scratch']
  %s0 = inlined_call_operand.hbm [shape: bf16[512,128], index: 0, kind: input, shape index: {}]
  %s1 = inlined_call_operand.vmem [shape: bf16[128,64], index: 1, kind: input, shape index: {}]
  %s2 = inlined_call_operand.vmem [shape: f32[1,64], index: 2, kind: input, shape index: {}]
  %s3 = inlined_call_operand.vmem [shape: f32[512,64], index: 3, kind: output, shape index: {}]
  %s4 = sld [smem:[#allocation0]]
  $region26: #{tpu_custom_call.1} parent=0
    _
  %s6 = ssub.s32 1, %s4
  %s7 = scalar_select 0, %s6, %s4
  $region1: #{tpu_custom_call.1} parent=0
    #allocation2 [shape = 'u8[131072]{0}', space=vmem, size = 0x20000, scoped, tag = 'input window, operand 0, single buffered']
    #allocation3 [shape = 's32[1]{0}', space=sflag, size = 0x4, scoped, tag = 'scoped memory for tpu_custom_call.1']
    %8 = vsyncpa [#allocation3], 0
    // Predicated region
    $region2: #{tpu_custom_call.1} parent=1 // pred_check
      _
    $region3: #{tpu_custom_call.1} parent=1 // pred_check_branch
      %10 = sbr.rel (0) target = $region5
    $region4: #{tpu_custom_call.1} parent=1 // pred_region
      %s12 = ssub.s32 4096, 4096
      %13 = vsyncadd [#allocation3], %s12
      %s14 = sshll.u32 [#allocation2], 4
      %s15 = int_to_ptr.vmem [resolvable:$true] %s14
      %20 = dma.hbm_to_vmem [thread:$0]  %s0, 4096, %s15, [#allocation3], 64, 64, 4
    $region5: #{tpu_custom_call.1} parent=1 // pred_fallthru
      _
    // Predicated region
    $region6: #{tpu_custom_call.1} parent=1 // pred_check
      _
    $region7: #{tpu_custom_call.1} parent=1 // pred_check_branch
      %22 = sbr.rel (0) target = $region9
    $region8: #{tpu_custom_call.1} parent=1 // pred_region
      _
    $region9: #{tpu_custom_call.1} parent=1 // pred_fallthru
      _
    // Predicated region
    $region10: #{tpu_custom_call.1} parent=1 // pred_check
      _
    $region11: #{tpu_custom_call.1} parent=1 // pred_check_branch
      %24 = sbr.rel (0) target = $region13
    $region12: #{tpu_custom_call.1} parent=1 // pred_region
      _
    $region13: #{tpu_custom_call.1} parent=1 // pred_fallthru
      _
    // Predicated region
    $region14: #{tpu_custom_call.1} parent=1 // pred_check
      _
    $region15: #{tpu_custom_call.1} parent=1 // pred_check_branch
      %26 = sbr.rel (0) target = $region17
    $region16: #{tpu_custom_call.1} parent=1 // pred_region
      %27 = dma.done [#allocation3], 4096
    $region17: #{tpu_custom_call.1} parent=1 // pred_fallthru
      _
    %v29 = vld [vmem:[#allocation2] sm:$0xf]
    %v30 = vld [vmem:[#allocation2 + $0x4] sm:$0xf]
    %v31 = vld [vmem:[#allocation2 + $0x8] sm:$0xf]
    %v32 = vld [vmem:[#allocation2 + $0xc] sm:$0xf]
    %v33 = vld [vmem:[#allocation2 + $0x10] sm:$0xf]
    %v34 = vld [vmem:[#allocation2 + $0x14] sm:$0xf]
    %v35 = vld [vmem:[#allocation2 + $0x18] sm:$0xf]
    %v36 = vld [vmem:[#allocation2 + $0x1c] sm:$0xf]
    %v37 = vld [vmem:[#allocation2 + $0x20] sm:$0xf]
    %v38 = vld [vmem:[#allocation2 + $0x24] sm:$0xf]
    %v39 = vld [vmem:[#allocation2 + $0x28] sm:$0xf]
    %v40 = vld [vmem:[#allocation2 + $0x2c] sm:$0xf]
    %v41 = vld [vmem:[#allocation2 + $0x30] sm:$0xf]
    %v42 = vld [vmem:[#allocation2 + $0x34] sm:$0xf]
    %v43 = vld [vmem:[#allocation2 + $0x38] sm:$0xf]
    %v44 = vld [vmem:[#allocation2 + $0x3c] sm:$0xf]
    %v45 = vld [vmem:[#allocation2 + $0x40] sm:$0xf]
    %v46 = vld [vmem:[#allocation2 + $0x44] sm:$0xf]
    %v47 = vld [vmem:[#allocation2 + $0x48] sm:$0xf]
    %v48 = vld [vmem:[#allocation2 + $0x4c] sm:$0xf]
    %v49 = vld [vmem:[#allocation2 + $0x50] sm:$0xf]
    %v50 = vld [vmem:[#allocation2 + $0x54] sm:$0xf]
    %v51 = vld [vmem:[#allocation2 + $0x58] sm:$0xf]
    %v52 = vld [vmem:[#allocation2 + $0x5c] sm:$0xf]
    %v53 = vld [vmem:[#allocation2 + $0x60] sm:$0xf]
    %v54 = vld [vmem:[#allocation2 + $0x64] sm:$0xf]
    %v55 = vld [vmem:[#allocation2 + $0x68] sm:$0xf]
    %v56 = vld [vmem:[#allocation2 + $0x6c] sm:$0xf]
    %v57 = vld [vmem:[#allocation2 + $0x70] sm:$0xf]
    %v58 = vld [vmem:[#allocation2 + $0x74] sm:$0xf]
    %v59 = vld [vmem:[#allocation2 + $0x78] sm:$0xf]
    %v60 = vld [vmem:[#allocation2 + $0x7c] sm:$0xf]
    %v61 = vld [vmem:[#allocation2 + $0x80] sm:$0xf]
    %v62 = vld [vmem:[#allocation2 + $0x84] sm:$0xf]
    %v63 = vld [vmem:[#allocation2 + $0x88] sm:$0xf]
    %v64 = vld [vmem:[#allocation2 + $0x8c] sm:$0xf]
    %v65 = vld [vmem:[#allocation2 + $0x90] sm:$0xf]
    %v66 = vld [vmem:[#allocation2 + $0x94] sm:$0xf]
    %v67 = vld [vmem:[#allocation2 + $0x98] sm:$0xf]
    %v68 = vld [vmem:[#allocation2 + $0x9c] sm:$0xf]
    %v69 = vld [vmem:[#allocation2 + $0xa0] sm:$0xf]
    %v70 = vld [vmem:[#allocation2 + $0xa4] sm:$0xf]
    %v71 = vld [vmem:[#allocation2 + $0xa8] sm:$0xf]
    %v72 = vld [vmem:[#allocation2 + $0xac] sm:$0xf]
    %v73 = vld [vmem:[#allocation2 + $0xb0] sm:$0xf]
    %v74 = vld [vmem:[#allocation2 + $0xb4] sm:$0xf]
    %v75 = vld [vmem:[#allocation2 + $0xb8] sm:$0xf]
    %v76 = vld [vmem:[#allocation2 + $0xbc] sm:$0xf]
    %v77 = vld [vmem:[#allocation2 + $0xc0] sm:$0xf]
    %v78 = vld [vmem:[#allocation2 + $0xc4] sm:$0xf]
    %v79 = vld [vmem:[#allocation2 + $0xc8] sm:$0xf]
    %v80 = vld [vmem:[#allocation2 + $0xcc] sm:$0xf]
    %v81 = vld [vmem:[#allocation2 + $0xd0] sm:$0xf]
    %v82 = vld [vmem:[#allocation2 + $0xd4] sm:$0xf]
    %v83 = vld [vmem:[#allocation2 + $0xd8] sm:$0xf]
    %v84 = vld [vmem:[#allocation2 + $0xdc] sm:$0xf]
    %v85 = vld [vmem:[#allocation2 + $0xe0] sm:$0xf]
    %v86 = vld [vmem:[#allocation2 + $0xe4] sm:$0xf]
    %v87 = vld [vmem:[#allocation2 + $0xe8] sm:$0xf]
    %v88 = vld [vmem:[#allocation2 + $0xec] sm:$0xf]
    %v89 = vld [vmem:[#allocation2 + $0xf0] sm:$0xf]
    %v90 = vld [vmem:[#allocation2 + $0xf4] sm:$0xf]
    %v91 = vld [vmem:[#allocation2 + $0xf8] sm:$0xf]
    %v92 = vld [vmem:[#allocation2 + $0xfc] sm:$0xf]
    %v93 = vld [vmem:[%s1] sm:$0xf]
    %v94 = vld [vmem:[%s1 + $0x4] sm:$0xf]
    %v95 = vld [vmem:[%s1 + $0x8] sm:$0xf]
    %v96 = vld [vmem:[%s1 + $0xc] sm:$0xf]
    %v97 = vld [vmem:[%s1 + $0x10] sm:$0xf]
    %v98 = vld [vmem:[%s1 + $0x14] sm:$0xf]
    %v99 = vld [vmem:[%s1 + $0x18] sm:$0xf]
    %v100 = vld [vmem:[%s1 + $0x1c] sm:$0xf]
    %v101 = vld [vmem:[%s1 + $0x20] sm:$0xf]
    %v102 = vld [vmem:[%s1 + $0x24] sm:$0xf]
    %v103 = vld [vmem:[%s1 + $0x28] sm:$0xf]
    %v104 = vld [vmem:[%s1 + $0x2c] sm:$0xf]
    %v105 = vld [vmem:[%s1 + $0x30] sm:$0xf]
    %v106 = vld [vmem:[%s1 + $0x34] sm:$0xf]
    %v107 = vld [vmem:[%s1 + $0x38] sm:$0xf]
    %v108 = vld [vmem:[%s1 + $0x3c] sm:$0xf]
    %v109 = vld [vmem:[%s2] sm:$0x1]
    %v111 = vlaneseq
    %v112 = vshrl.u32 %v111, 7
    %v113 = vsub.s32 0, %v112
    %v114 = vrot.slane %v109, %v113
    %v180 = vunpack.c.l.b16 %v29
    %v181 = vunpack.c.l.b16 %v30
    %v182 = vunpack.c.l.b16 %v31
    %v183 = vunpack.c.l.b16 %v32
    %v184 = vunpack.c.l.b16 %v33
    %v185 = vunpack.c.l.b16 %v34
    %v186 = vunpack.c.l.b16 %v35
    %v187 = vunpack.c.l.b16 %v36
    %v188 = vunpack.c.l.b16 %v37
    %v189 = vunpack.c.l.b16 %v38
    %v190 = vunpack.c.l.b16 %v39
    %v191 = vunpack.c.l.b16 %v40
    %v192 = vunpack.c.l.b16 %v41
    %v193 = vunpack.c.l.b16 %v42
    %v194 = vunpack.c.l.b16 %v43
    %v195 = vunpack.c.l.b16 %v44
    %v196 = vunpack.c.l.b16 %v45
    %v197 = vunpack.c.l.b16 %v46
    %v198 = vunpack.c.l.b16 %v47
    %v199 = vunpack.c.l.b16 %v48
    %v200 = vunpack.c.l.b16 %v49
    %v201 = vunpack.c.l.b16 %v50
    %v202 = vunpack.c.l.b16 %v51
    %v203 = vunpack.c.l.b16 %v52
    %v204 = vunpack.c.l.b16 %v53
    %v205 = vunpack.c.l.b16 %v54
    %v206 = vunpack.c.l.b16 %v55
    %v207 = vunpack.c.l.b16 %v56
    %v208 = vunpack.c.l.b16 %v57
    %v209 = vunpack.c.l.b16 %v58
    %v210 = vunpack.c.l.b16 %v59
    %v211 = vunpack.c.l.b16 %v60
    %v212 = vunpack.c.l.b16 %v61
    %v213 = vunpack.c.l.b16 %v62
    %v214 = vunpack.c.l.b16 %v63
    %v215 = vunpack.c.l.b16 %v64
    %v216 = vunpack.c.l.b16 %v65
    %v217 = vunpack.c.l.b16 %v66
    %v218 = vunpack.c.l.b16 %v67
    %v219 = vunpack.c.l.b16 %v68
    %v220 = vunpack.c.l.b16 %v69
    %v221 = vunpack.c.l.b16 %v70
    %v222 = vunpack.c.l.b16 %v71
    %v223 = vunpack.c.l.b16 %v72
    %v224 = vunpack.c.l.b16 %v73
    %v225 = vunpack.c.l.b16 %v74
    %v226 = vunpack.c.l.b16 %v75
    %v227 = vunpack.c.l.b16 %v76
    %v228 = vunpack.c.l.b16 %v77
    %v229 = vunpack.c.l.b16 %v78
    %v230 = vunpack.c.l.b16 %v79
    %v231 = vunpack.c.l.b16 %v80
    %v232 = vunpack.c.l.b16 %v81
    %v233 = vunpack.c.l.b16 %v82
    %v234 = vunpack.c.l.b16 %v83
    %v235 = vunpack.c.l.b16 %v84
    %v236 = vunpack.c.l.b16 %v85
    %v237 = vunpack.c.l.b16 %v86
    %v238 = vunpack.c.l.b16 %v87
    %v239 = vunpack.c.l.b16 %v88
    %v240 = vunpack.c.l.b16 %v89
    %v241 = vunpack.c.l.b16 %v90
    %v242 = vunpack.c.l.b16 %v91
    %v243 = vunpack.c.l.b16 %v92
    %v244 = vpack.c.b16 %v181, %v180
    %v245 = vpack.c.b16 %v183, %v182
    %v246 = vpack.c.b16 %v185, %v184
    %v247 = vpack.c.b16 %v187, %v186
    %v248 = vpack.c.b16 %v189, %v188
    %v249 = vpack.c.b16 %v191, %v190
    %v250 = vpack.c.b16 %v193, %v192
    %v251 = vpack.c.b16 %v195, %v194
    %v252 = vpack.c.b16 %v197, %v196
    %v253 = vpack.c.b16 %v199, %v198
    %v254 = vpack.c.b16 %v201, %v200
    %v255 = vpack.c.b16 %v203, %v202
    %v256 = vpack.c.b16 %v205, %v204
    %v257 = vpack.c.b16 %v207, %v206
    %v258 = vpack.c.b16 %v209, %v208
    %v259 = vpack.c.b16 %v211, %v210
    %v260 = vpack.c.b16 %v213, %v212
    %v261 = vpack.c.b16 %v215, %v214
    %v262 = vpack.c.b16 %v217, %v216
    %v263 = vpack.c.b16 %v219, %v218
    %v264 = vpack.c.b16 %v221, %v220
    %v265 = vpack.c.b16 %v223, %v222
    %v266 = vpack.c.b16 %v225, %v224
    %v267 = vpack.c.b16 %v227, %v226
    %v268 = vpack.c.b16 %v229, %v228
    %v269 = vpack.c.b16 %v231, %v230
    %v270 = vpack.c.b16 %v233, %v232
    %v271 = vpack.c.b16 %v235, %v234
    %v272 = vpack.c.b16 %v237, %v236
    %v273 = vpack.c.b16 %v239, %v238
    %v274 = vpack.c.b16 %v241, %v240
    %v275 = vpack.c.b16 %v243, %v242
    %v324 = vunpack.c.l.b16 %v93
    %v325 = vunpack.c.l.b16 %v94
    %v326 = vunpack.c.l.b16 %v95
    %v327 = vunpack.c.l.b16 %v96
    %v328 = vunpack.c.l.b16 %v97
    %v329 = vunpack.c.l.b16 %v98
    %v330 = vunpack.c.l.b16 %v99
    %v331 = vunpack.c.l.b16 %v100
    %v332 = vunpack.c.l.b16 %v101
    %v333 = vunpack.c.l.b16 %v102
    %v334 = vunpack.c.l.b16 %v103
    %v335 = vunpack.c.l.b16 %v104
    %v336 = vunpack.c.l.b16 %v105
    %v337 = vunpack.c.l.b16 %v106
    %v338 = vunpack.c.l.b16 %v107
    %v339 = vunpack.c.l.b16 %v108
    %v340 = vpack.c.b16 %v325, %v324
    %v341 = vpack.c.b16 %v327, %v326
    %v342 = vpack.c.b16 %v329, %v328
    %v343 = vpack.c.b16 %v331, %v330
    %v344 = vpack.c.b16 %v333, %v332
    %v345 = vpack.c.b16 %v335, %v334
    %v346 = vpack.c.b16 %v337, %v336
    %v347 = vpack.c.b16 %v339, %v338
    %356 = vmatprep.subr.bf16.mxu0 0
    %357 = vmatpush1.bf16.msra.mxu0 %v340
    %358 = vmatprep.subr.bf16.mxu0 0
    %359 = vmatpush1.bf16.msra.mxu0 %v341
    %360 = vmatprep.subr.bf16.mxu0 0
    %361 = vmatpush1.bf16.msra.mxu0 %v342
    %362 = vmatprep.subr.bf16.mxu0 0
    %363 = vmatpush1.bf16.msra.mxu0 %v343
    %364 = vmatprep.subr.bf16.mxu0 0
    %365 = vmatpush1.bf16.msra.mxu0 %v344
    %366 = vmatprep.subr.bf16.mxu0 0
    %367 = vmatpush1.bf16.msra.mxu0 %v345
    %368 = vmatprep.subr.bf16.mxu0 0
    %369 = vmatpush1.bf16.msra.mxu0 %v346
    %370 = vmatprep.subr.bf16.mxu0 0
    %371 = vmatpush1.bf16.msra.mxu0 %v347
    %372 = vmatprep.subr.bf16.mxu0 0
    %373 = vmatpush1.bf16.msra.mxu0 0
    %374 = vmatprep.subr.bf16.mxu0 0
    %375 = vmatpush1.bf16.msra.mxu0 0
    %376 = vmatprep.subr.bf16.mxu0 0
    %377 = vmatpush1.bf16.msra.mxu0 0
    %378 = vmatprep.subr.bf16.mxu0 0
    %379 = vmatpush1.bf16.msra.mxu0 0
    %380 = vmatprep.subr.bf16.mxu0 0
    %381 = vmatpush1.bf16.msra.mxu0 0
    %382 = vmatprep.subr.bf16.mxu0 0
    %383 = vmatpush1.bf16.msra.mxu0 0
    %384 = vmatprep.subr.bf16.mxu0 0
    %385 = vmatpush1.bf16.msra.mxu0 0
    %386 = vmatprep.subr.bf16.mxu0 0
    %387 = vmatpush1.bf16.msra.mxu0 0
    %388 = vmatprep.mubr.bf16.mxu0 0
    %389 = vmatmul.mubr.bf16.gmra.mrb[0].mxu0 %v244
    %v390 = vpop.f32.mrb[0].mxu0
    %v391 = vadd.f32 %v114, %v390
    %v392 = vpop.f32.mrb[0].mxu0
    %v393 = vpop.f32.mrb[0].mxu0
    %v394 = vadd.f32 %v114, %v393
    %v395 = vpop.f32.mrb[0].mxu0
    %396 = vmatprep.mubr.bf16.mxu0 0
    %397 = vmatmul.mubr.bf16.gmra.mrb[0].mxu0 %v245
    %v398 = vpop.f32.mrb[0].mxu0
    %v399 = vadd.f32 %v114, %v398
    %v400 = vpop.f32.mrb[0].mxu0
    %v401 = vpop.f32.mrb[0].mxu0
    %v402 = vadd.f32 %v114, %v401
    %v403 = vpop.f32.mrb[0].mxu0
    %404 = vmatprep.mubr.bf16.mxu0 0
    %405 = vmatmul.mubr.bf16.gmra.mrb[0].mxu0 %v246
    %v406 = vpop.f32.mrb[0].mxu0
    %v407 = vadd.f32 %v114, %v406
    %v408 = vpop.f32.mrb[0].mxu0
    %v409 = vpop.f32.mrb[0].mxu0
    %v410 = vadd.f32 %v114, %v409
    %v411 = vpop.f32.mrb[0].mxu0
    %412 = vmatprep.mubr.bf16.mxu0 0
    %413 = vmatmul.mubr.bf16.gmra.mrb[0].mxu0 %v247
    %v414 = vpop.f32.mrb[0].mxu0
    %v415 = vadd.f32 %v114, %v414
    %v416 = vpop.f32.mrb[0].mxu0
    %v417 = vpop.f32.mrb[0].mxu0
    %v418 = vadd.f32 %v114, %v417
    %v419 = vpop.f32.mrb[0].mxu0
    %420 = vmatprep.mubr.bf16.mxu0 0
    %421 = vmatmul.mubr.bf16.gmra.mrb[0].mxu0 %v248
    %v422 = vpop.f32.mrb[0].mxu0
    %v423 = vadd.f32 %v114, %v422
    %v424 = vpop.f32.mrb[0].mxu0
    %v425 = vpop.f32.mrb[0].mxu0
    %v426 = vadd.f32 %v114, %v425
    %v427 = vpop.f32.mrb[0].mxu0
    %428 = vmatprep.mubr.bf16.mxu0 0
    %429 = vmatmul.mubr.bf16.gmra.mrb[0].mxu0 %v249
    %v430 = vpop.f32.mrb[0].mxu0
    %v431 = vadd.f32 %v114, %v430
    %v432 = vpop.f32.mrb[0].mxu0
    %v433 = vpop.f32.mrb[0].mxu0
    %v434 = vadd.f32 %v114, %v433
    %v435 = vpop.f32.mrb[0].mxu0
    %436 = vmatprep.mubr.bf16.mxu0 0
    %437 = vmatmul.mubr.bf16.gmra.mrb[0].mxu0 %v250
    %v438 = vpop.f32.mrb[0].mxu0
    %v439 = vadd.f32 %v114, %v438
    %v440 = vpop.f32.mrb[0].mxu0
    %v441 = vpop.f32.mrb[0].mxu0
    %v442 = vadd.f32 %v114, %v441
    %v443 = vpop.f32.mrb[0].mxu0
    %444 = vmatprep.mubr.bf16.mxu0 0
    %445 = vmatmul.mubr.bf16.gmra.mrb[0].mxu0 %v251
    %v446 = vpop.f32.mrb[0].mxu0
    %v447 = vadd.f32 %v114, %v446
    %v448 = vpop.f32.mrb[0].mxu0
    %v449 = vpop.f32.mrb[0].mxu0
    %v450 = vadd.f32 %v114, %v449
    %v451 = vpop.f32.mrb[0].mxu0
    %452 = vmatprep.mubr.bf16.mxu0 0
    %453 = vmatmul.mubr.bf16.gmra.mrb[0].mxu0 %v252
    %v454 = vpop.f32.mrb[0].mxu0
    %v455 = vadd.f32 %v114, %v454
    %v456 = vpop.f32.mrb[0].mxu0
    %v457 = vpop.f32.mrb[0].mxu0
    %v458 = vadd.f32 %v114, %v457
    %v459 = vpop.f32.mrb[0].mxu0
    %460 = vmatprep.mubr.bf16.mxu0 0
    %461 = vmatmul.mubr.bf16.gmra.mrb[0].mxu0 %v253
    %v462 = vpop.f32.mrb[0].mxu0
    %v463 = vadd.f32 %v114, %v462
    %v464 = vpop.f32.mrb[0].mxu0
    %v465 = vpop.f32.mrb[0].mxu0
    %v466 = vadd.f32 %v114, %v465
    %v467 = vpop.f32.mrb[0].mxu0
    %468 = vmatprep.mubr.bf16.mxu0 0
    %469 = vmatmul.mubr.bf16.gmra.mrb[0].mxu0 %v254
    %v470 = vpop.f32.mrb[0].mxu0
    %v471 = vadd.f32 %v114, %v470
    %v472 = vpop.f32.mrb[0].mxu0
    %v473 = vpop.f32.mrb[0].mxu0
    %v474 = vadd.f32 %v114, %v473
    %v475 = vpop.f32.mrb[0].mxu0
    %476 = vmatprep.mubr.bf16.mxu0 0
    %477 = vmatmul.mubr.bf16.gmra.mrb[0].mxu0 %v255
    %v478 = vpop.f32.mrb[0].mxu0
    %v479 = vadd.f32 %v114, %v478
    %v480 = vpop.f32.mrb[0].mxu0
    %v481 = vpop.f32.mrb[0].mxu0
    %v482 = vadd.f32 %v114, %v481
    %v483 = vpop.f32.mrb[0].mxu0
    %484 = vmatprep.mubr.bf16.mxu0 0
    %485 = vmatmul.mubr.bf16.gmra.mrb[0].mxu0 %v256
    %v486 = vpop.f32.mrb[0].mxu0
    %v487 = vadd.f32 %v114, %v486
    %v488 = vpop.f32.mrb[0].mxu0
    %v489 = vpop.f32.mrb[0].mxu0
    %v490 = vadd.f32 %v114, %v489
    %v491 = vpop.f32.mrb[0].mxu0
    %492 = vmatprep.mubr.bf16.mxu0 0
    %493 = vmatmul.mubr.bf16.gmra.mrb[0].mxu0 %v257
    %v494 = vpop.f32.mrb[0].mxu0
    %v495 = vadd.f32 %v114, %v494
    %v496 = vpop.f32.mrb[0].mxu0
    %v497 = vpop.f32.mrb[0].mxu0
    %v498 = vadd.f32 %v114, %v497
    %v499 = vpop.f32.mrb[0].mxu0
    %500 = vmatprep.mubr.bf16.mxu0 0
    %501 = vmatmul.mubr.bf16.gmra.mrb[0].mxu0 %v258
    %v502 = vpop.f32.mrb[0].mxu0
    %v503 = vadd.f32 %v114, %v502
    %v504 = vpop.f32.mrb[0].mxu0
    %v505 = vpop.f32.mrb[0].mxu0
    %v506 = vadd.f32 %v114, %v505
    %v507 = vpop.f32.mrb[0].mxu0
    %508 = vmatprep.mubr.bf16.mxu0 0
    %509 = vmatmul.mubr.bf16.gmra.mrb[0].mxu0 %v259
    %v510 = vpop.f32.mrb[0].mxu0
    %v511 = vadd.f32 %v114, %v510
    %v512 = vpop.f32.mrb[0].mxu0
    %v513 = vpop.f32.mrb[0].mxu0
    %v514 = vadd.f32 %v114, %v513
    %v515 = vpop.f32.mrb[0].mxu0
    %516 = vmatprep.mubr.bf16.mxu0 0
    %517 = vmatmul.mubr.bf16.gmra.mrb[0].mxu0 %v260
    %v518 = vpop.f32.mrb[0].mxu0
    %v519 = vadd.f32 %v114, %v518
    %v520 = vpop.f32.mrb[0].mxu0
    %v521 = vpop.f32.mrb[0].mxu0
    %v522 = vadd.f32 %v114, %v521
    %v523 = vpop.f32.mrb[0].mxu0
    %524 = vmatprep.mubr.bf16.mxu0 0
    %525 = vmatmul.mubr.bf16.gmra.mrb[0].mxu0 %v261
    %v526 = vpop.f32.mrb[0].mxu0
    %v527 = vadd.f32 %v114, %v526
    %v528 = vpop.f32.mrb[0].mxu0
    %v529 = vpop.f32.mrb[0].mxu0
    %v530 = vadd.f32 %v114, %v529
    %v531 = vpop.f32.mrb[0].mxu0
    %532 = vmatprep.mubr.bf16.mxu0 0
    %533 = vmatmul.mubr.bf16.gmra.mrb[0].mxu0 %v262
    %v534 = vpop.f32.mrb[0].mxu0
    %v535 = vadd.f32 %v114, %v534
    %v536 = vpop.f32.mrb[0].mxu0
    %v537 = vpop.f32.mrb[0].mxu0
    %v538 = vadd.f32 %v114, %v537
    %v539 = vpop.f32.mrb[0].mxu0
    %540 = vmatprep.mubr.bf16.mxu0 0
    %541 = vmatmul.mubr.bf16.gmra.mrb[0].mxu0 %v263
    %v542 = vpop.f32.mrb[0].mxu0
    %v543 = vadd.f32 %v114, %v542
    %v544 = vpop.f32.mrb[0].mxu0
    %v545 = vpop.f32.mrb[0].mxu0
    %v546 = vadd.f32 %v114, %v545
    %v547 = vpop.f32.mrb[0].mxu0
    %548 = vmatprep.mubr.bf16.mxu0 0
    %549 = vmatmul.mubr.bf16.gmra.mrb[0].mxu0 %v264
    %v550 = vpop.f32.mrb[0].mxu0
    %v551 = vadd.f32 %v114, %v550
    %v552 = vpop.f32.mrb[0].mxu0
    %v553 = vpop.f32.mrb[0].mxu0
    %v554 = vadd.f32 %v114, %v553
    %v555 = vpop.f32.mrb[0].mxu0
    %556 = vmatprep.mubr.bf16.mxu0 0
    %557 = vmatmul.mubr.bf16.gmra.mrb[0].mxu0 %v265
    %v558 = vpop.f32.mrb[0].mxu0
    %v559 = vadd.f32 %v114, %v558
    %v560 = vpop.f32.mrb[0].mxu0
    %v561 = vpop.f32.mrb[0].mxu0
    %v562 = vadd.f32 %v114, %v561
    %v563 = vpop.f32.mrb[0].mxu0
    %564 = vmatprep.mubr.bf16.mxu0 0
    %565 = vmatmul.mubr.bf16.gmra.mrb[0].mxu0 %v266
    %v566 = vpop.f32.mrb[0].mxu0
    %v567 = vadd.f32 %v114, %v566
    %v568 = vpop.f32.mrb[0].mxu0
    %v569 = vpop.f32.mrb[0].mxu0
    %v570 = vadd.f32 %v114, %v569
    %v571 = vpop.f32.mrb[0].mxu0
    %572 = vmatprep.mubr.bf16.mxu0 0
    %573 = vmatmul.mubr.bf16.gmra.mrb[0].mxu0 %v267
    %v574 = vpop.f32.mrb[0].mxu0
    %v575 = vadd.f32 %v114, %v574
    %v576 = vpop.f32.mrb[0].mxu0
    %v577 = vpop.f32.mrb[0].mxu0
    %v578 = vadd.f32 %v114, %v577
    %v579 = vpop.f32.mrb[0].mxu0
    %580 = vmatprep.mubr.bf16.mxu0 0
    %581 = vmatmul.mubr.bf16.gmra.mrb[0].mxu0 %v268
    %v582 = vpop.f32.mrb[0].mxu0
    %v583 = vadd.f32 %v114, %v582
    %v584 = vpop.f32.mrb[0].mxu0
    %v585 = vpop.f32.mrb[0].mxu0
    %v586 = vadd.f32 %v114, %v585
    %v587 = vpop.f32.mrb[0].mxu0
    %588 = vmatprep.mubr.bf16.mxu0 0
    %589 = vmatmul.mubr.bf16.gmra.mrb[0].mxu0 %v269
    %v590 = vpop.f32.mrb[0].mxu0
    %v591 = vadd.f32 %v114, %v590
    %v592 = vpop.f32.mrb[0].mxu0
    %v593 = vpop.f32.mrb[0].mxu0
    %v594 = vadd.f32 %v114, %v593
    %v595 = vpop.f32.mrb[0].mxu0
    %596 = vmatprep.mubr.bf16.mxu0 0
    %597 = vmatmul.mubr.bf16.gmra.mrb[0].mxu0 %v270
    %v598 = vpop.f32.mrb[0].mxu0
    %v599 = vadd.f32 %v114, %v598
    %v600 = vpop.f32.mrb[0].mxu0
    %v601 = vpop.f32.mrb[0].mxu0
    %v602 = vadd.f32 %v114, %v601
    %v603 = vpop.f32.mrb[0].mxu0
    %604 = vmatprep.mubr.bf16.mxu0 0
    %605 = vmatmul.mubr.bf16.gmra.mrb[0].mxu0 %v271
    %v606 = vpop.f32.mrb[0].mxu0
    %v607 = vadd.f32 %v114, %v606
    %v608 = vpop.f32.mrb[0].mxu0
    %v609 = vpop.f32.mrb[0].mxu0
    %v610 = vadd.f32 %v114, %v609
    %v611 = vpop.f32.mrb[0].mxu0
    %612 = vmatprep.mubr.bf16.mxu0 0
    %613 = vmatmul.mubr.bf16.gmra.mrb[0].mxu0 %v272
    %v614 = vpop.f32.mrb[0].mxu0
    %v615 = vadd.f32 %v114, %v614
    %v616 = vpop.f32.mrb[0].mxu0
    %v617 = vpop.f32.mrb[0].mxu0
    %v618 = vadd.f32 %v114, %v617
    %v619 = vpop.f32.mrb[0].mxu0
    %620 = vmatprep.mubr.bf16.mxu0 0
    %621 = vmatmul.mubr.bf16.gmra.mrb[0].mxu0 %v273
    %v622 = vpop.f32.mrb[0].mxu0
    %v623 = vadd.f32 %v114, %v622
    %v624 = vpop.f32.mrb[0].mxu0
    %v625 = vpop.f32.mrb[0].mxu0
    %v626 = vadd.f32 %v114, %v625
    %v627 = vpop.f32.mrb[0].mxu0
    %628 = vmatprep.mubr.bf16.mxu0 0
    %629 = vmatmul.mubr.bf16.gmra.mrb[0].mxu0 %v274
    %v630 = vpop.f32.mrb[0].mxu0
    %v631 = vadd.f32 %v114, %v630
    %v632 = vpop.f32.mrb[0].mxu0
    %v633 = vpop.f32.mrb[0].mxu0
    %v634 = vadd.f32 %v114, %v633
    %v635 = vpop.f32.mrb[0].mxu0
    %636 = vmatprep.mubr.bf16.mxu0 0
    %637 = vmatmul.mubr.bf16.gmra.mrb[0].mxu0 %v275
    %v638 = vpop.f32.mrb[0].mxu0
    %v639 = vadd.f32 %v114, %v638
    %v640 = vpop.f32.mrb[0].mxu0
    %v641 = vpop.f32.mrb[0].mxu0
    %v642 = vadd.f32 %v114, %v641
    %v643 = vpop.f32.mrb[0].mxu0
    %644 = vdwg.mxu0
    %vm645 = vcmp.ge.f32.partialorder %v391, 0.0
    %vm646 = vcmp.ge.f32.partialorder %v394, 0.0
    %vm647 = vcmp.ge.f32.partialorder %v399, 0.0
    %vm648 = vcmp.ge.f32.partialorder %v402, 0.0
    %vm649 = vcmp.ge.f32.partialorder %v407, 0.0
    %vm650 = vcmp.ge.f32.partialorder %v410, 0.0
    %vm651 = vcmp.ge.f32.partialorder %v415, 0.0
    %vm652 = vcmp.ge.f32.partialorder %v418, 0.0
    %vm653 = vcmp.ge.f32.partialorder %v423, 0.0
    %vm654 = vcmp.ge.f32.partialorder %v426, 0.0
    %vm655 = vcmp.ge.f32.partialorder %v431, 0.0
    %vm656 = vcmp.ge.f32.partialorder %v434, 0.0
    %vm657 = vcmp.ge.f32.partialorder %v439, 0.0
    %vm658 = vcmp.ge.f32.partialorder %v442, 0.0
    %vm659 = vcmp.ge.f32.partialorder %v447, 0.0
    %vm660 = vcmp.ge.f32.partialorder %v450, 0.0
    %vm661 = vcmp.ge.f32.partialorder %v455, 0.0
    %vm662 = vcmp.ge.f32.partialorder %v458, 0.0
    %vm663 = vcmp.ge.f32.partialorder %v463, 0.0
    %vm664 = vcmp.ge.f32.partialorder %v466, 0.0
    %vm665 = vcmp.ge.f32.partialorder %v471, 0.0
    %vm666 = vcmp.ge.f32.partialorder %v474, 0.0
    %vm667 = vcmp.ge.f32.partialorder %v479, 0.0
    %vm668 = vcmp.ge.f32.partialorder %v482, 0.0
    %vm669 = vcmp.ge.f32.partialorder %v487, 0.0
    %vm670 = vcmp.ge.f32.partialorder %v490, 0.0
    %vm671 = vcmp.ge.f32.partialorder %v495, 0.0
    %vm672 = vcmp.ge.f32.partialorder %v498, 0.0
    %vm673 = vcmp.ge.f32.partialorder %v503, 0.0
    %vm674 = vcmp.ge.f32.partialorder %v506, 0.0
    %vm675 = vcmp.ge.f32.partialorder %v511, 0.0
    %vm676 = vcmp.ge.f32.partialorder %v514, 0.0
    %vm677 = vcmp.ge.f32.partialorder %v519, 0.0
    %vm678 = vcmp.ge.f32.partialorder %v522, 0.0
    %vm679 = vcmp.ge.f32.partialorder %v527, 0.0
    %vm680 = vcmp.ge.f32.partialorder %v530, 0.0
    %vm681 = vcmp.ge.f32.partialorder %v535, 0.0
    %vm682 = vcmp.ge.f32.partialorder %v538, 0.0
    %vm683 = vcmp.ge.f32.partialorder %v543, 0.0
    %vm684 = vcmp.ge.f32.partialorder %v546, 0.0
    %vm685 = vcmp.ge.f32.partialorder %v551, 0.0
    %vm686 = vcmp.ge.f32.partialorder %v554, 0.0
    %vm687 = vcmp.ge.f32.partialorder %v559, 0.0
    %vm688 = vcmp.ge.f32.partialorder %v562, 0.0
    %vm689 = vcmp.ge.f32.partialorder %v567, 0.0
    %vm690 = vcmp.ge.f32.partialorder %v570, 0.0
    %vm691 = vcmp.ge.f32.partialorder %v575, 0.0
    %vm692 = vcmp.ge.f32.partialorder %v578, 0.0
    %vm693 = vcmp.ge.f32.partialorder %v583, 0.0
    %vm694 = vcmp.ge.f32.partialorder %v586, 0.0
    %vm695 = vcmp.ge.f32.partialorder %v591, 0.0
    %vm696 = vcmp.ge.f32.partialorder %v594, 0.0
    %vm697 = vcmp.ge.f32.partialorder %v599, 0.0
    %vm698 = vcmp.ge.f32.partialorder %v602, 0.0
    %vm699 = vcmp.ge.f32.partialorder %v607, 0.0
    %vm700 = vcmp.ge.f32.partialorder %v610, 0.0
    %vm701 = vcmp.ge.f32.partialorder %v615, 0.0
    %vm702 = vcmp.ge.f32.partialorder %v618, 0.0
    %vm703 = vcmp.ge.f32.partialorder %v623, 0.0
    %vm704 = vcmp.ge.f32.partialorder %v626, 0.0
    %vm705 = vcmp.ge.f32.partialorder %v631, 0.0
    %vm706 = vcmp.ge.f32.partialorder %v634, 0.0
    %vm707 = vcmp.ge.f32.partialorder %v639, 0.0
    %vm708 = vcmp.ge.f32.partialorder %v642, 0.0
    %v709 = vmul.f32 %v391, 0.2
    %v710 = vmul.f32 %v394, 0.2
    %v711 = vmul.f32 %v399, 0.2
    %v712 = vmul.f32 %v402, 0.2
    %v713 = vmul.f32 %v407, 0.2
    %v714 = vmul.f32 %v410, 0.2
    %v715 = vmul.f32 %v415, 0.2
    %v716 = vmul.f32 %v418, 0.2
    %v717 = vmul.f32 %v423, 0.2
    %v718 = vmul.f32 %v426, 0.2
    %v719 = vmul.f32 %v431, 0.2
    %v720 = vmul.f32 %v434, 0.2
    %v721 = vmul.f32 %v439, 0.2
    %v722 = vmul.f32 %v442, 0.2
    %v723 = vmul.f32 %v447, 0.2
    %v724 = vmul.f32 %v450, 0.2
    %v725 = vmul.f32 %v455, 0.2
    %v726 = vmul.f32 %v458, 0.2
    %v727 = vmul.f32 %v463, 0.2
    %v728 = vmul.f32 %v466, 0.2
    %v729 = vmul.f32 %v471, 0.2
    %v730 = vmul.f32 %v474, 0.2
    %v731 = vmul.f32 %v479, 0.2
    %v732 = vmul.f32 %v482, 0.2
    %v733 = vmul.f32 %v487, 0.2
    %v734 = vmul.f32 %v490, 0.2
    %v735 = vmul.f32 %v495, 0.2
    %v736 = vmul.f32 %v498, 0.2
    %v737 = vmul.f32 %v503, 0.2
    %v738 = vmul.f32 %v506, 0.2
    %v739 = vmul.f32 %v511, 0.2
    %v740 = vmul.f32 %v514, 0.2
    %v741 = vmul.f32 %v519, 0.2
    %v742 = vmul.f32 %v522, 0.2
    %v743 = vmul.f32 %v527, 0.2
    %v744 = vmul.f32 %v530, 0.2
    %v745 = vmul.f32 %v535, 0.2
    %v746 = vmul.f32 %v538, 0.2
    %v747 = vmul.f32 %v543, 0.2
    %v748 = vmul.f32 %v546, 0.2
    %v749 = vmul.f32 %v551, 0.2
    %v750 = vmul.f32 %v554, 0.2
    %v751 = vmul.f32 %v559, 0.2
    %v752 = vmul.f32 %v562, 0.2
    %v753 = vmul.f32 %v567, 0.2
    %v754 = vmul.f32 %v570, 0.2
    %v755 = vmul.f32 %v575, 0.2
    %v756 = vmul.f32 %v578, 0.2
    %v757 = vmul.f32 %v583, 0.2
    %v758 = vmul.f32 %v586, 0.2
    %v759 = vmul.f32 %v591, 0.2
    %v760 = vmul.f32 %v594, 0.2
    %v761 = vmul.f32 %v599, 0.2
    %v762 = vmul.f32 %v602, 0.2
    %v763 = vmul.f32 %v607, 0.2
    %v764 = vmul.f32 %v610, 0.2
    %v765 = vmul.f32 %v615, 0.2
    %v766 = vmul.f32 %v618, 0.2
    %v767 = vmul.f32 %v623, 0.2
    %v768 = vmul.f32 %v626, 0.2
    %v769 = vmul.f32 %v631, 0.2
    %v770 = vmul.f32 %v634, 0.2
    %v771 = vmul.f32 %v639, 0.2
    %v772 = vmul.f32 %v642, 0.2
    %v773 = vsel %vm645, %v391, %v709
    %v774 = vsel %vm646, %v394, %v710
    %v775 = vsel %vm647, %v399, %v711
    %v776 = vsel %vm648, %v402, %v712
    %v777 = vsel %vm649, %v407, %v713
    %v778 = vsel %vm650, %v410, %v714
    %v779 = vsel %vm651, %v415, %v715
    %v780 = vsel %vm652, %v418, %v716
    %v781 = vsel %vm653, %v423, %v717
    %v782 = vsel %vm654, %v426, %v718
    %v783 = vsel %vm655, %v431, %v719
    %v784 = vsel %vm656, %v434, %v720
    %v785 = vsel %vm657, %v439, %v721
    %v786 = vsel %vm658, %v442, %v722
    %v787 = vsel %vm659, %v447, %v723
    %v788 = vsel %vm660, %v450, %v724
    %v789 = vsel %vm661, %v455, %v725
    %v790 = vsel %vm662, %v458, %v726
    %v791 = vsel %vm663, %v463, %v727
    %v792 = vsel %vm664, %v466, %v728
    %v793 = vsel %vm665, %v471, %v729
    %v794 = vsel %vm666, %v474, %v730
    %v795 = vsel %vm667, %v479, %v731
    %v796 = vsel %vm668, %v482, %v732
    %v797 = vsel %vm669, %v487, %v733
    %v798 = vsel %vm670, %v490, %v734
    %v799 = vsel %vm671, %v495, %v735
    %v800 = vsel %vm672, %v498, %v736
    %v801 = vsel %vm673, %v503, %v737
    %v802 = vsel %vm674, %v506, %v738
    %v803 = vsel %vm675, %v511, %v739
    %v804 = vsel %vm676, %v514, %v740
    %v805 = vsel %vm677, %v519, %v741
    %v806 = vsel %vm678, %v522, %v742
    %v807 = vsel %vm679, %v527, %v743
    %v808 = vsel %vm680, %v530, %v744
    %v809 = vsel %vm681, %v535, %v745
    %v810 = vsel %vm682, %v538, %v746
    %v811 = vsel %vm683, %v543, %v747
    %v812 = vsel %vm684, %v546, %v748
    %v813 = vsel %vm685, %v551, %v749
    %v814 = vsel %vm686, %v554, %v750
    %v815 = vsel %vm687, %v559, %v751
    %v816 = vsel %vm688, %v562, %v752
    %v817 = vsel %vm689, %v567, %v753
    %v818 = vsel %vm690, %v570, %v754
    %v819 = vsel %vm691, %v575, %v755
    %v820 = vsel %vm692, %v578, %v756
    %v821 = vsel %vm693, %v583, %v757
    %v822 = vsel %vm694, %v586, %v758
    %v823 = vsel %vm695, %v591, %v759
    %v824 = vsel %vm696, %v594, %v760
    %v825 = vsel %vm697, %v599, %v761
    %v826 = vsel %vm698, %v602, %v762
    %v827 = vsel %vm699, %v607, %v763
    %v828 = vsel %vm700, %v610, %v764
    %v829 = vsel %vm701, %v615, %v765
    %v830 = vsel %vm702, %v618, %v766
    %v831 = vsel %vm703, %v623, %v767
    %v832 = vsel %vm704, %v626, %v768
    %v833 = vsel %vm705, %v631, %v769
    %v834 = vsel %vm706, %v634, %v770
    %v835 = vsel %vm707, %v639, %v771
    %v836 = vsel %vm708, %v642, %v772
    %vm837 = vcmask 523264
    %838 = vst.msk [vmem:[%s3] sm:$0xff] %vm837, %v773
    %839 = vst.msk [vmem:[%s3 + $0x8] sm:$0xff] %vm837, %v774
    %840 = vst.msk [vmem:[%s3 + $0x10] sm:$0xff] %vm837, %v775
    %841 = vst.msk [vmem:[%s3 + $0x18] sm:$0xff] %vm837, %v776
    %842 = vst.msk [vmem:[%s3 + $0x20] sm:$0xff] %vm837, %v777
    %843 = vst.msk [vmem:[%s3 + $0x28] sm:$0xff] %vm837, %v778
    %844 = vst.msk [vmem:[%s3 + $0x30] sm:$0xff] %vm837, %v779
    %845 = vst.msk [vmem:[%s3 + $0x38] sm:$0xff] %vm837, %v780
    %846 = vst.msk [vmem:[%s3 + $0x40] sm:$0xff] %vm837, %v781
    %847 = vst.msk [vmem:[%s3 + $0x48] sm:$0xff] %vm837, %v782
    %848 = vst.msk [vmem:[%s3 + $0x50] sm:$0xff] %vm837, %v783
    %849 = vst.msk [vmem:[%s3 + $0x58] sm:$0xff] %vm837, %v784
    %850 = vst.msk [vmem:[%s3 + $0x60] sm:$0xff] %vm837, %v785
    %851 = vst.msk [vmem:[%s3 + $0x68] sm:$0xff] %vm837, %v786
    %852 = vst.msk [vmem:[%s3 + $0x70] sm:$0xff] %vm837, %v787
    %853 = vst.msk [vmem:[%s3 + $0x78] sm:$0xff] %vm837, %v788
    %854 = vst.msk [vmem:[%s3 + $0x80] sm:$0xff] %vm837, %v789
    %855 = vst.msk [vmem:[%s3 + $0x88] sm:$0xff] %vm837, %v790
    %856 = vst.msk [vmem:[%s3 + $0x90] sm:$0xff] %vm837, %v791
    %857 = vst.msk [vmem:[%s3 + $0x98] sm:$0xff] %vm837, %v792
    %858 = vst.msk [vmem:[%s3 + $0xa0] sm:$0xff] %vm837, %v793
    %859 = vst.msk [vmem:[%s3 + $0xa8] sm:$0xff] %vm837, %v794
    %860 = vst.msk [vmem:[%s3 + $0xb0] sm:$0xff] %vm837, %v795
    %861 = vst.msk [vmem:[%s3 + $0xb8] sm:$0xff] %vm837, %v796
    %862 = vst.msk [vmem:[%s3 + $0xc0] sm:$0xff] %vm837, %v797
    %863 = vst.msk [vmem:[%s3 + $0xc8] sm:$0xff] %vm837, %v798
    %864 = vst.msk [vmem:[%s3 + $0xd0] sm:$0xff] %vm837, %v799
    %865 = vst.msk [vmem:[%s3 + $0xd8] sm:$0xff] %vm837, %v800
    %866 = vst.msk [vmem:[%s3 + $0xe0] sm:$0xff] %vm837, %v801
    %867 = vst.msk [vmem:[%s3 + $0xe8] sm:$0xff] %vm837, %v802
    %868 = vst.msk [vmem:[%s3 + $0xf0] sm:$0xff] %vm837, %v803
    %869 = vst.msk [vmem:[%s3 + $0xf8] sm:$0xff] %vm837, %v804
    %870 = vst.msk [vmem:[%s3 + $0x100] sm:$0xff] %vm837, %v805
    %871 = vst.msk [vmem:[%s3 + $0x108] sm:$0xff] %vm837, %v806
    %872 = vst.msk [vmem:[%s3 + $0x110] sm:$0xff] %vm837, %v807
    %873 = vst.msk [vmem:[%s3 + $0x118] sm:$0xff] %vm837, %v808
    %874 = vst.msk [vmem:[%s3 + $0x120] sm:$0xff] %vm837, %v809
    %875 = vst.msk [vmem:[%s3 + $0x128] sm:$0xff] %vm837, %v810
    %876 = vst.msk [vmem:[%s3 + $0x130] sm:$0xff] %vm837, %v811
    %877 = vst.msk [vmem:[%s3 + $0x138] sm:$0xff] %vm837, %v812
    %878 = vst.msk [vmem:[%s3 + $0x140] sm:$0xff] %vm837, %v813
    %879 = vst.msk [vmem:[%s3 + $0x148] sm:$0xff] %vm837, %v814
    %880 = vst.msk [vmem:[%s3 + $0x150] sm:$0xff] %vm837, %v815
    %881 = vst.msk [vmem:[%s3 + $0x158] sm:$0xff] %vm837, %v816
    %882 = vst.msk [vmem:[%s3 + $0x160] sm:$0xff] %vm837, %v817
    %883 = vst.msk [vmem:[%s3 + $0x168] sm:$0xff] %vm837, %v818
    %884 = vst.msk [vmem:[%s3 + $0x170] sm:$0xff] %vm837, %v819
    %885 = vst.msk [vmem:[%s3 + $0x178] sm:$0xff] %vm837, %v820
    %886 = vst.msk [vmem:[%s3 + $0x180] sm:$0xff] %vm837, %v821
    %887 = vst.msk [vmem:[%s3 + $0x188] sm:$0xff] %vm837, %v822
    %888 = vst.msk [vmem:[%s3 + $0x190] sm:$0xff] %vm837, %v823
    %889 = vst.msk [vmem:[%s3 + $0x198] sm:$0xff] %vm837, %v824
    %890 = vst.msk [vmem:[%s3 + $0x1a0] sm:$0xff] %vm837, %v825
    %891 = vst.msk [vmem:[%s3 + $0x1a8] sm:$0xff] %vm837, %v826
    %892 = vst.msk [vmem:[%s3 + $0x1b0] sm:$0xff] %vm837, %v827
    %893 = vst.msk [vmem:[%s3 + $0x1b8] sm:$0xff] %vm837, %v828
    %894 = vst.msk [vmem:[%s3 + $0x1c0] sm:$0xff] %vm837, %v829
    %895 = vst.msk [vmem:[%s3 + $0x1c8] sm:$0xff] %vm837, %v830
    %896 = vst.msk [vmem:[%s3 + $0x1d0] sm:$0xff] %vm837, %v831
    %897 = vst.msk [vmem:[%s3 + $0x1d8] sm:$0xff] %vm837, %v832
    %898 = vst.msk [vmem:[%s3 + $0x1e0] sm:$0xff] %vm837, %v833
    %899 = vst.msk [vmem:[%s3 + $0x1e8] sm:$0xff] %vm837, %v834
    %900 = vst.msk [vmem:[%s3 + $0x1f0] sm:$0xff] %vm837, %v835
    %901 = vst.msk [vmem:[%s3 + $0x1f8] sm:$0xff] %vm837, %v836
    // Predicated region
    $region18: #{tpu_custom_call.1} parent=1 // pred_check
      _
    $region19: #{tpu_custom_call.1} parent=1 // pred_check_branch
      %903 = sbr.rel (0) target = $region21
    $region20: #{tpu_custom_call.1} parent=1 // pred_region
      _
    $region21: #{tpu_custom_call.1} parent=1 // pred_fallthru
      _
    // Predicated region
    $region22: #{tpu_custom_call.1} parent=1 // pred_check
      _
    $region23: #{tpu_custom_call.1} parent=1 // pred_check_branch
      %905 = sbr.rel (0) target = $region25
    $region24: #{tpu_custom_call.1} parent=1 // pred_region
      _
    $region25: #{tpu_custom_call.1} parent=1 // pred_fallthru
      _
    %906 = vsyncpa [#allocation3], 1

</llo_original>
